<compile_context>
chip_gen: v7x
topology: tpu7x:2x2x1
jax: 0.10.0
libtpu: 0.0.40
codegen_flags: <defaults>
</compile_context>

<pallas_src>
import jax
import jax.numpy as jnp
from jax.experimental import pallas as pl
from jax.experimental.pallas import tpu as pltpu

_LANE = 128
_LANE_COLS = 1024            # 8 * 128: lane-dense slab width (full vst stores)
_SMALL_N = 64 * 1024         # below this, plain XLA fusion is already optimal
_MIN_STEPS = 4               # target pipeline depth for mid-size inputs
_SUBLANE_BY_ITEMSIZE = {4: 8, 2: 16, 1: 32}


def _round_up(a, b):
    return ((a + b - 1) // b) * b


def _elementwise_kernel(x_ref, o_ref):
    # Promote in-kernel (cheap, VPU has slack; kernel is HBM-bound) and compute
    # in f32 for precision, casting on the store.
    xv = x_ref[...].astype(jnp.float32)
    o_ref[...] = (xv * 0.75 + 1.25).astype(o_ref.dtype)


def _block_budget(cols, in_itemsize, out_itemsize, sublane):
    """Pick max block rows + explicit VMEM limit based on the chip's VMEM size."""
    vmem_phys = None
    try:
        vmem_phys = pltpu.get_tpu_info().vmem_capacity_bytes
    except Exception:
        vmem_phys = None

    if vmem_phys is not None and vmem_phys <= 64 * 1024 * 1024:
        # v7x-class: 64 MiB physical VMEM, ~3.2 TB/s HBM -> bigger blocks so the
        # ~0.35us per-step overhead stays small; 2x(in+out) stays <= ~32 MiB.
        target_step_bytes = 16 * 1024 * 1024      # in + out per step
        vmem_limit = 48 * 1024 * 1024
    else:
        # v5e / v6e (128 MiB physical) or unknown: ~2-4 MiB blocks already sit
        # at ~85% of HBM roofline; explicit limit keeps double-buffering safe.
        target_step_bytes = 4 * 1024 * 1024
        vmem_limit = 32 * 1024 * 1024

    bytes_per_row = cols * (in_itemsize + out_itemsize)
    max_rows = max(sublane, target_step_bytes // bytes_per_row)
    max_rows = max(sublane, (max_rows // sublane) * sublane)
    return max_rows, vmem_limit


def pt_module_forward(x, *, force_pallas=False):
    """Applies ((x + 2) * 3 - 1) / 4 elementwise via a Pallas TPU kernel."""
    orig_shape = x.shape
    in_dtype = jnp.dtype(x.dtype)

    # PyTorch true-division promotes integer/bool tensors to float.
    if jnp.issubdtype(in_dtype, jnp.floating):
        out_dtype = x.dtype
    else:
        out_dtype = jnp.float32
    out_itemsize = jnp.dtype(out_dtype).itemsize

    n = int(x.size)
    if n == 0:
        return jnp.zeros(orig_shape, out_dtype)

    # Tiny inputs: fixed pallas_call overhead dominates; XLA fusion is optimal.
    if n < _SMALL_N and not force_pallas:
        y = x.astype(jnp.float32) * 0.75 + 1.25
        return y.astype(out_dtype).reshape(orig_shape)

    xf = x.reshape(-1)

    # Widest lane-dense column count that divides n -> zero padding/slicing.
    cols = None
    for c in (_LANE_COLS, 512, 256, _LANE):
        if n % c == 0:
            cols = c
            break
    padded = False
    if cols is None:
        # Truly ragged: pad only up to one row of 1024 (tiny pad), slice after.
        cols = _LANE_COLS
        rows = pl.cdiv(n, cols)
        xf = jnp.pad(xf, (0, rows * cols - n))
        padded = True

    rows = xf.shape[0] // cols
    x2 = xf.reshape(rows, cols)

    sublane = _SUBLANE_BY_ITEMSIZE.get(in_dtype.itemsize, 8)
    max_rows, vmem_limit = _block_budget(cols, in_dtype.itemsize, out_itemsize, sublane)

    # ~4 pipeline steps for mid-size inputs, capped by the per-block budget.
    tr = _round_up(pl.cdiv(rows, _MIN_STEPS), sublane)
    tr = max(sublane, min(tr, max_rows))

    grid = (pl.cdiv(rows, tr),)  # last block may be partial; Pallas masks OOB rows

    out2 = pl.pallas_call(
        _elementwise_kernel,
        out_shape=jax.ShapeDtypeStruct((rows, cols), out_dtype),
        grid=grid,
        in_specs=[pl.BlockSpec((tr, cols), lambda i: (i, 0))],
        out_specs=pl.BlockSpec((tr, cols), lambda i: (i, 0)),
        compiler_params=pltpu.CompilerParams(
            dimension_semantics=("parallel",),
            vmem_limit_bytes=vmem_limit,
        ),
    )(x2)

    out_flat = out2.reshape(-1)
    if padded:
        out_flat = out_flat[:n]
    return out_flat.reshape(orig_shape)


def _ref(x):
    xf = x.astype(jnp.float32)
    return ((xf + 2.0) * 3.0 - 1.0) / 4.0


if __name__ == "__main__":
    key = jax.random.PRNGKey(0)
    k1, k2, k3 = jax.random.split(key, 3)

    # 1) Small NCHW-like input (n divisible by 1024 -> zero-pad path),
    #    forced through the Pallas path; exercises a partial (rows < tr) block.
    x_small = jax.random.normal(k1, (2, 4, 16, 16), dtype=jnp.float32)
    out_small = jax.block_until_ready(pt_module_forward(x_small, force_pallas=True))
    assert out_small.shape == x_small.shape
    assert out_small.dtype == x_small.dtype
    assert jnp.allclose(out_small, _ref(x_small), atol=1e-5, rtol=1e-5)

    # 2) Larger ragged shape (no dim multiple of 8/128) -> minimal-pad path,
    #    multi-block pipelined grid with a masked partial final block.
    x_big = jax.random.normal(k2, (8, 4, 33, 130), dtype=jnp.float32)
    out_big = jax.block_until_ready(pt_module_forward(x_big))
    assert out_big.shape == x_big.shape
    assert out_big.dtype == x_big.dtype
    assert jnp.allclose(out_big, _ref(x_big), atol=1e-5, rtol=1e-5)

    # 3) Integer input: promotion to f32 happens inside the kernel (PyTorch
    #    true-division semantics -> float output).
    x_int = jax.random.randint(k3, (4, 8, 32), minval=-50, maxval=50, dtype=jnp.int32)
    out_int = jax.block_until_ready(pt_module_forward(x_int, force_pallas=True))
    assert out_int.shape == x_int.shape
    assert out_int.dtype == jnp.float32
    assert jnp.allclose(out_int, _ref(x_int), atol=1e-5, rtol=1e-5)

    print("KERNEL_OK")
</pallas_src>

<mosaic_0001>
module attributes {stable_mosaic.version = 11 : i64} {
  func.func @_elementwise_kernel(%arg0: i32, %arg1: memref<8x1024xf32, #tpu.memory_space<vmem>>, %arg2: memref<8x1024xf32, #tpu.memory_space<vmem>>) attributes {dimension_semantics = [#tpu.dimension_semantics<parallel>], iteration_bounds = array<i64: 1>, scalar_prefetch = 0 : i64, scratch_operands = 0 : i64, tpu.core_type = #tpu.core_type<tc>, window_params = [{transform_indices = @transform_0, window_bounds = array<i64: 8, 1024>}, {transform_indices = @transform_1, window_bounds = array<i64: 8, 1024>}]} {
    %c0 = arith.constant 0 : index
    %c0_0 = arith.constant 0 : index
    %0 = vector.load %arg1[%c0, %c0_0] : memref<8x1024xf32, #tpu.memory_space<vmem>>, vector<8x1024xf32>
    %cst = arith.constant 7.500000e-01 : f32
    %1 = vector.broadcast %cst : f32 to vector<8x1024xf32>
    %2 = arith.mulf %0, %1 : vector<8x1024xf32>
    %cst_1 = arith.constant 1.250000e+00 : f32
    %3 = vector.broadcast %cst_1 : f32 to vector<8x1024xf32>
    %4 = arith.addf %2, %3 : vector<8x1024xf32>
    %c0_2 = arith.constant 0 : index
    %c0_3 = arith.constant 0 : index
    %5 = vector.load %arg2[%c0_2, %c0_3] : memref<8x1024xf32, #tpu.memory_space<vmem>>, vector<8x1024xf32>
    tpu.vector_store %arg2[%c0_2, %c0_3], %4 {strides = array<i32>} : memref<8x1024xf32, #tpu.memory_space<vmem>>, vector<8x1024xf32>,
    return
  }
  func.func @transform_0(%arg0: i32) -> (i32, i32) {
    %c0_i32 = arith.constant 0 : i32
    %c0_i32_0 = arith.constant 0 : i32
    return %arg0, %c0_i32 : i32, i32
  }
  func.func @transform_1(%arg0: i32) -> (i32, i32) {
    %c0_i32 = arith.constant 0 : i32
    %c0_i32_0 = arith.constant 0 : i32
    return %arg0, %c0_i32 : i32, i32
  }
}

</mosaic_0001>

<llo_original>
// kernel: tpu_custom_call.1
$region0: #{tpu_custom_call.1}
  #allocation0 [shape = 'u32[]', space=smem, size = 0x4, offset = 0x4, fixed_abs, tag = 'smem constant byte address 0x4 - core index']
  #allocation1 [shape = 'u32[144,128]{1,0:T(1,128)}', space=vmem, size = 0x12000, scoped, tag = 'internal scratch']
  %s0 = inlined_call_operand.hbm [shape: f32[2,1024], index: 0, kind: input, shape index: {}]
  %s1 = inlined_call_operand.hbm [shape: f32[2,1024], index: 1, kind: output, shape index: {}]
  %s2 = sld [smem:[#allocation0]]
  $region18: #{tpu_custom_call.1} parent=0
    _
  %s4 = ssub.s32 1, %s2
  %s5 = scalar_select 0, %s4, %s2
  $region1: #{tpu_custom_call.1} parent=0
    #allocation2 [shape = 'u8[32768]{0}', space=vmem, size = 0x8000, scoped, tag = 'input window, operand 0, single buffered']
    #allocation3 [shape = 's32[1]{0}', space=sflag, size = 0x4, scoped, tag = 'scoped memory for tpu_custom_call.1']
    #allocation4 [shape = 's32[1]{0}', space=sflag, size = 0x4, scoped, tag = 'scoped memory for tpu_custom_call.1']
    #allocation5 [shape = 'u8[32768]{0}', space=vmem, size = 0x8000, scoped, tag = 'output window, operand 0, single buffered']
    %6 = vsyncpa [#allocation3], 0
    %7 = vsyncpa [#allocation4], 0
    // Predicated region
    $region2: #{tpu_custom_call.1} parent=1 // pred_check
      _
    $region3: #{tpu_custom_call.1} parent=1 // pred_check_branch
      %9 = sbr.rel (0) target = $region5
    $region4: #{tpu_custom_call.1} parent=1 // pred_region
      %s11 = ssub.s32 1024, 256
      %12 = vsyncadd [#allocation3], %s11
      %s13 = sshll.u32 [#allocation2], 4
      %s14 = int_to_ptr.vmem [resolvable:$true] %s13
      %19 = dma.hbm_to_vmem [thread:$0]  %s0, 256, %s14, [#allocation3], 256, 256, 16
    $region5: #{tpu_custom_call.1} parent=1 // pred_fallthru
      _
    // Predicated region
    $region6: #{tpu_custom_call.1} parent=1 // pred_check
      _
    $region7: #{tpu_custom_call.1} parent=1 // pred_check_branch
      %21 = sbr.rel (0) target = $region9
    $region8: #{tpu_custom_call.1} parent=1 // pred_region
      %22 = dma.done [#allocation3], 1024
    $region9: #{tpu_custom_call.1} parent=1 // pred_fallthru
      _
    %v23 = vld [vmem:[#allocation2] sm:$0xff]
    %v24 = vld [vmem:[#allocation2 + $0x8] sm:$0xff]
    %v25 = vld [vmem:[#allocation2 + $0x10] sm:$0xff]
    %v26 = vld [vmem:[#allocation2 + $0x18] sm:$0xff]
    %v27 = vld [vmem:[#allocation2 + $0x20] sm:$0xff]
    %v28 = vld [vmem:[#allocation2 + $0x28] sm:$0xff]
    %v29 = vld [vmem:[#allocation2 + $0x30] sm:$0xff]
    %v30 = vld [vmem:[#allocation2 + $0x38] sm:$0xff]
    %v31 = vmul.f32 %v23, 0.75
    %v32 = vmul.f32 %v24, 0.75
    %v33 = vmul.f32 %v25, 0.75
    %v34 = vmul.f32 %v26, 0.75
    %v35 = vmul.f32 %v27, 0.75
    %v36 = vmul.f32 %v28, 0.75
    %v37 = vmul.f32 %v29, 0.75
    %v38 = vmul.f32 %v30, 0.75
    %v39 = vadd.f32 %v31, 1.25
    %v40 = vadd.f32 %v32, 1.25
    %v41 = vadd.f32 %v33, 1.25
    %v42 = vadd.f32 %v34, 1.25
    %v43 = vadd.f32 %v35, 1.25
    %v44 = vadd.f32 %v36, 1.25
    %v45 = vadd.f32 %v37, 1.25
    %v46 = vadd.f32 %v38, 1.25
    %47 = vst [vmem:[#allocation5] sm:$0xff] %v39
    %48 = vst [vmem:[#allocation5 + $0x8] sm:$0xff] %v40
    %49 = vst [vmem:[#allocation5 + $0x10] sm:$0xff] %v41
    %50 = vst [vmem:[#allocation5 + $0x18] sm:$0xff] %v42
    %51 = vst [vmem:[#allocation5 + $0x20] sm:$0xff] %v43
    %52 = vst [vmem:[#allocation5 + $0x28] sm:$0xff] %v44
    %53 = vst [vmem:[#allocation5 + $0x30] sm:$0xff] %v45
    %54 = vst [vmem:[#allocation5 + $0x38] sm:$0xff] %v46
    // Predicated region
    $region10: #{tpu_custom_call.1} parent=1 // pred_check
      _
    $region11: #{tpu_custom_call.1} parent=1 // pred_check_branch
      %56 = sbr.rel (0) target = $region13
    $region12: #{tpu_custom_call.1} parent=1 // pred_region
      %s58 = ssub.s32 1024, 256
      %59 = vsyncadd [#allocation4], %s58
      %s60 = sshll.u32 [#allocation5], 4
      %s61 = int_to_ptr.vmem [resolvable:$true] %s60
      %66 = dma.vmem_to_hbm [thread:$0]  %s61, 256, %s1, [#allocation4], 256, 256, 16
    $region13: #{tpu_custom_call.1} parent=1 // pred_fallthru
      _
    // Predicated region
    $region14: #{tpu_custom_call.1} parent=1 // pred_check
      _
    $region15: #{tpu_custom_call.1} parent=1 // pred_check_branch
      %68 = sbr.rel (0) target = $region17
    $region16: #{tpu_custom_call.1} parent=1 // pred_region
      %69 = dma.done [#allocation4], 1024
    $region17: #{tpu_custom_call.1} parent=1 // pred_fallthru
      _
    %70 = vsyncpa [#allocation3], 1
    %71 = vsyncpa [#allocation4], 1

</llo_original>
